<compile_context>
chip_gen: v6e
topology: v6e:2x2x1
jax: 0.10.0
libtpu: 0.0.40
codegen_flags: <defaults>
</compile_context>

<pallas_src>
import jax
import jax.numpy as jnp
from jax.experimental import pallas as pl
from jax.experimental.pallas import tpu as pltpu

# table sizes (from the PyTorch module)
MINUTE_SIZE = 60
HOUR_SIZE = 24
WEEKDAY_SIZE = 7
DAY_SIZE = 32
MONTH_SIZE = 13
YEAR_SIZE = 20

# offsets into the concatenated table: [minute | hour | weekday | day | month | year]
OFF_MINUTE = 0
OFF_HOUR = OFF_MINUTE + MINUTE_SIZE          # 60
OFF_WEEKDAY = OFF_HOUR + HOUR_SIZE           # 84
OFF_DAY = OFF_WEEKDAY + WEEKDAY_SIZE         # 91
OFF_MONTH = OFF_DAY + DAY_SIZE               # 123
OFF_YEAR = OFF_MONTH + MONTH_SIZE            # 136
TOTAL_ROWS = OFF_YEAR + YEAR_SIZE            # 156
V_PAD = 160                                  # pad vocab to a multiple of 8 sublanes

# Per-input-column offsets.  x columns are [year, month, weekday, day, hour, minute];
# the year column additionally needs the -2020 shift, folded into its offset.
COL_OFFSETS = (OFF_YEAR - 2020, OFF_MONTH, OFF_WEEKDAY, OFF_DAY, OFF_HOUR, OFF_MINUTE)


def _round_up(n, m):
    return -(-n // m) * m


def temporal_embed_kernel(off_ref, idx_ref, table_ref, out_ref):
    """off_ref:   (6,) int32 in SMEM — per-column offsets into the combined table.
    idx_ref:   (TM, 6) int32 raw time features [year, month, weekday, day, hour, minute].
    table_ref: (V_PAD, D) f32 combined embedding table (resident, constant block).
    out_ref:   (TM, D) f32 = sum of the six embedding rows per token.
    """
    idx = idx_ref[...]                                         # (TM, 6)
    table = table_ref[...]                                     # (V, D)
    tm = idx_ref.shape[0]
    v = table_ref.shape[0]

    row_ids = jax.lax.broadcasted_iota(jnp.int32, (tm, v), 1)  # (TM, V)

    # The six offset ranges are disjoint, so OR of the one-hot masks == their sum.
    # Build the multi-hot with bool ORs and a single cast (cuts VALU work ~2x vs
    # six compare+cast+f32-add rounds).
    hit = (idx[:, 0:1] + off_ref[0]) == row_ids
    for f in range(1, 6):                                      # static unroll: 6 features
        hit = jnp.logical_or(hit, (idx[:, f:f + 1] + off_ref[f]) == row_ids)
    multihot = hit.astype(jnp.float32)                         # (TM, V)

    out_ref[...] = jnp.dot(multihot, table, preferred_element_type=jnp.float32)


def temporal_embedding(x, table, *, tm=1024):
    """x: (B, S, 6) int32 time features [year, month, weekday, day, hour, minute];
    table: (V_PAD, D) f32 combined table.  Returns (B, S, D) f32, matching
    TemporalEmbedding.forward."""
    B, S, F = x.shape
    assert F == 6
    V, D = table.shape
    N = B * S

    # (N, 6) view of the raw features — no offsetting / reordering here (fused in-kernel),
    # so no extra HBM round trip of an index intermediate.
    idx = x.reshape(N, 6).astype(jnp.int32)

    # Effective tile: large enough to amortize per-step overhead, but capped so tiny
    # inputs still work; pad N up to a multiple of the tile (padded rows use index 0,
    # which stays in range, and are sliced off afterwards).
    tm_eff = min(tm, _round_up(N, 8))
    n_pad = _round_up(N, tm_eff)
    if n_pad != N:
        idx = jnp.pad(idx, ((0, n_pad - N), (0, 0)))

    offsets = jnp.asarray(COL_OFFSETS, dtype=jnp.int32)        # (6,), scalar-prefetched

    # NOTE: like the original module, year values outside [2020, 2020+YEAR_SIZE) are not
    # range-checked (torch.nn.Embedding would raise); here they simply contribute a zero
    # or aliased row.  TODO(synk): add an optional clamp/assert in the wrapper if needed.
    out = pl.pallas_call(
        temporal_embed_kernel,
        out_shape=jax.ShapeDtypeStruct((n_pad, D), jnp.float32),
        grid_spec=pltpu.PrefetchScalarGridSpec(
            num_scalar_prefetch=1,
            grid=(n_pad // tm_eff,),
            in_specs=[
                pl.BlockSpec((tm_eff, 6), lambda i, off: (i, 0)),
                pl.BlockSpec((V, D), lambda i, off: (0, 0)),   # resident table
            ],
            out_specs=pl.BlockSpec((tm_eff, D), lambda i, off: (i, 0)),
        ),
        compiler_params=pltpu.CompilerParams(
            dimension_semantics=("parallel",)
        ),
    )(offsets, idx, table)

    if n_pad != N:
        out = out[:N]
    return out.reshape(B, S, D)


def make_params(d_model, key):
    """Deterministic N(0,1) init (like torch.nn.Embedding) for all six tables,
    concatenated into one padded table."""
    keys = jax.random.split(key, 6)
    sizes = [MINUTE_SIZE, HOUR_SIZE, WEEKDAY_SIZE, DAY_SIZE, MONTH_SIZE, YEAR_SIZE]
    tables = [
        jax.random.normal(k, (n, d_model), dtype=jnp.float32)
        for k, n in zip(keys, sizes)
    ]
    combined = jnp.concatenate(tables, axis=0)                    # (156, D)
    pad = jnp.zeros((V_PAD - TOTAL_ROWS, d_model), jnp.float32)   # never indexed
    return jnp.concatenate([combined, pad], axis=0), tables


def reference(x, tables):
    minute_t, hour_t, weekday_t, day_t, month_t, year_t = tables
    minute = minute_t[x[:, :, 5]]
    hour = hour_t[x[:, :, 4]]
    weekday = weekday_t[x[:, :, 2]]
    day = day_t[x[:, :, 3]]
    month = month_t[x[:, :, 1]]
    year = year_t[x[:, :, 0] - 2020]
    return minute + hour + weekday + day + month + year


if __name__ == "__main__":
    d_model = 32
    B, S = 2, 8

    key = jax.random.PRNGKey(0)
    k_tab, k0, k1, k2, k3, k4, k5 = jax.random.split(key, 7)

    combined_table, tables = make_params(d_model, k_tab)

    # Deterministic synthetic time features in valid ranges.
    year = jax.random.randint(k0, (B, S), 2020, 2020 + YEAR_SIZE)
    month = jax.random.randint(k1, (B, S), 0, MONTH_SIZE)
    weekday = jax.random.randint(k2, (B, S), 0, WEEKDAY_SIZE)
    day = jax.random.randint(k3, (B, S), 0, DAY_SIZE)
    hour = jax.random.randint(k4, (B, S), 0, HOUR_SIZE)
    minute = jax.random.randint(k5, (B, S), 0, MINUTE_SIZE)
    x = jnp.stack([year, month, weekday, day, hour, minute], axis=-1).astype(jnp.int32)

    out = temporal_embedding(x, combined_table)
    out = jax.block_until_ready(out)

    ref = reference(x, tables)
    assert out.shape == (B, S, d_model)
    assert jnp.allclose(out, ref, atol=1e-5, rtol=1e-5)

    print("KERNEL_OK")
</pallas_src>

<mosaic_0001>
module attributes {stable_mosaic.version = 11 : i64} {
  func.func @temporal_embed_kernel(%arg0: i32, %arg1: memref<6xi32, #tpu.memory_space<smem>>, %arg2: memref<16x6xi32, #tpu.memory_space<vmem>>, %arg3: memref<160x32xf32, #tpu.memory_space<vmem>>, %arg4: memref<16x32xf32, #tpu.memory_space<vmem>>) attributes {dimension_semantics = [#tpu.dimension_semantics<parallel>], iteration_bounds = array<i64: 1>, scalar_prefetch = 1 : i64, scratch_operands = 0 : i64, tpu.core_type = #tpu.core_type<tc>, window_params = [{transform_indices = @transform_0, window_bounds = array<i64: 16, 6>}, {pipeline_mode = #tpu.pipeline_mode<synchronous>, transform_indices = @transform_1, window_bounds = array<i64: 160, 32>}, {transform_indices = @transform_2, window_bounds = array<i64: 16, 32>}]} {
    %c0 = arith.constant 0 : index
    %c0_0 = arith.constant 0 : index
    %0 = vector.load %arg2[%c0, %c0_0] : memref<16x6xi32, #tpu.memory_space<vmem>>, vector<16x6xi32>
    %c0_1 = arith.constant 0 : index
    %c0_2 = arith.constant 0 : index
    %1 = vector.load %arg3[%c0_1, %c0_2] : memref<160x32xf32, #tpu.memory_space<vmem>>, vector<160x32xf32>
    %2 = tpu.iota {dimensions = array<i32: 1>} : vector<16x160xi32>
    %3 = vector.extract_strided_slice %0 {offsets = [0, 0], sizes = [16, 1], strides = [1, 1]} : vector<16x6xi32> to vector<16x1xi32>
    %c0_3 = arith.constant 0 : index
    %4 = memref.load %arg1[%c0_3] : memref<6xi32, #tpu.memory_space<smem>>
    %5 = vector.broadcast %4 : i32 to vector<16x1xi32>
    %6 = arith.addi %3, %5 : vector<16x1xi32>
    %7 = vector.broadcast %6 : vector<16x1xi32> to vector<16x160xi32>
    %8 = arith.cmpi eq, %7, %2 : vector<16x160xi32>
    %9 = vector.extract_strided_slice %0 {offsets = [0, 1], sizes = [16, 1], strides = [1, 1]} : vector<16x6xi32> to vector<16x1xi32>
    %c1 = arith.constant 1 : index
    %10 = memref.load %arg1[%c1] : memref<6xi32, #tpu.memory_space<smem>>
    %11 = vector.broadcast %10 : i32 to vector<16x1xi32>
    %12 = arith.addi %9, %11 : vector<16x1xi32>
    %13 = vector.broadcast %12 : vector<16x1xi32> to vector<16x160xi32>
    %14 = arith.cmpi eq, %13, %2 : vector<16x160xi32>
    %15 = arith.ori %8, %14 : vector<16x160xi1>
    %16 = vector.extract_strided_slice %0 {offsets = [0, 2], sizes = [16, 1], strides = [1, 1]} : vector<16x6xi32> to vector<16x1xi32>
    %c2 = arith.constant 2 : index
    %17 = memref.load %arg1[%c2] : memref<6xi32, #tpu.memory_space<smem>>
    %18 = vector.broadcast %17 : i32 to vector<16x1xi32>
    %19 = arith.addi %16, %18 : vector<16x1xi32>
    %20 = vector.broadcast %19 : vector<16x1xi32> to vector<16x160xi32>
    %21 = arith.cmpi eq, %20, %2 : vector<16x160xi32>
    %22 = arith.ori %15, %21 : vector<16x160xi1>
    %23 = vector.extract_strided_slice %0 {offsets = [0, 3], sizes = [16, 1], strides = [1, 1]} : vector<16x6xi32> to vector<16x1xi32>
    %c3 = arith.constant 3 : index
    %24 = memref.load %arg1[%c3] : memref<6xi32, #tpu.memory_space<smem>>
    %25 = vector.broadcast %24 : i32 to vector<16x1xi32>
    %26 = arith.addi %23, %25 : vector<16x1xi32>
    %27 = vector.broadcast %26 : vector<16x1xi32> to vector<16x160xi32>
    %28 = arith.cmpi eq, %27, %2 : vector<16x160xi32>
    %29 = arith.ori %22, %28 : vector<16x160xi1>
    %30 = vector.extract_strided_slice %0 {offsets = [0, 4], sizes = [16, 1], strides = [1, 1]} : vector<16x6xi32> to vector<16x1xi32>
    %c4 = arith.constant 4 : index
    %31 = memref.load %arg1[%c4] : memref<6xi32, #tpu.memory_space<smem>>
    %32 = vector.broadcast %31 : i32 to vector<16x1xi32>
    %33 = arith.addi %30, %32 : vector<16x1xi32>
    %34 = vector.broadcast %33 : vector<16x1xi32> to vector<16x160xi32>
    %35 = arith.cmpi eq, %34, %2 : vector<16x160xi32>
    %36 = arith.ori %29, %35 : vector<16x160xi1>
    %37 = vector.extract_strided_slice %0 {offsets = [0, 5], sizes = [16, 1], strides = [1, 1]} : vector<16x6xi32> to vector<16x1xi32>
    %c5 = arith.constant 5 : index
    %38 = memref.load %arg1[%c5] : memref<6xi32, #tpu.memory_space<smem>>
    %39 = vector.broadcast %38 : i32 to vector<16x1xi32>
    %40 = arith.addi %37, %39 : vector<16x1xi32>
    %41 = vector.broadcast %40 : vector<16x1xi32> to vector<16x160xi32>
    %42 = arith.cmpi eq, %41, %2 : vector<16x160xi32>
    %43 = arith.ori %36, %42 : vector<16x160xi1>
    %44 = arith.extui %43 : vector<16x160xi1> to vector<16x160xi32>
    %45 = arith.sitofp %44 : vector<16x160xi32> to vector<16x160xf32>
    %cst = arith.constant dense<0.000000e+00> : vector<16x32xf32>
    %46 = tpu.matmul %45, %1, %cst {dimension_numbers = #tpu.dot_dimension_numbers<[1], [0], [0], [1], [0, 0, 1, 1], [], []>} : vector<16x160xf32>, vector<160x32xf32>, vector<16x32xf32> -> vector<16x32xf32>
    %c0_4 = arith.constant 0 : index
    %c0_5 = arith.constant 0 : index
    %47 = vector.load %arg4[%c0_4, %c0_5] : memref<16x32xf32, #tpu.memory_space<vmem>>, vector<16x32xf32>
    tpu.vector_store %arg4[%c0_4, %c0_5], %46 {strides = array<i32>} : memref<16x32xf32, #tpu.memory_space<vmem>>, vector<16x32xf32>,
    return
  }
  func.func @transform_0(%arg0: i32, %arg1: memref<6xi32, #tpu.memory_space<smem>>) -> (i32, i32) {
    %c0_i32 = arith.constant 0 : i32
    %c0_i32_0 = arith.constant 0 : i32
    return %arg0, %c0_i32 : i32, i32
  }
  func.func @transform_1(%arg0: i32, %arg1: memref<6xi32, #tpu.memory_space<smem>>) -> (i32, i32) {
    %c0_i32 = arith.constant 0 : i32
    %c0_i32_0 = arith.constant 0 : i32
    %c0_i32_1 = arith.constant 0 : i32
    return %c0_i32, %c0_i32_0 : i32, i32
  }
  func.func @transform_2(%arg0: i32, %arg1: memref<6xi32, #tpu.memory_space<smem>>) -> (i32, i32) {
    %c0_i32 = arith.constant 0 : i32
    %c0_i32_0 = arith.constant 0 : i32
    return %arg0, %c0_i32 : i32, i32
  }
}

</mosaic_0001>

<llo_original>
// kernel: tpu_custom_call.1
$region0: #{tpu_custom_call.1}
  #allocation0 [shape = 'u32[]', space=smem, size = 0x4, offset = 0x4, fixed_abs, tag = 'smem constant byte address 0x4 - core index']
  #allocation1 [shape = 'u32[144,128]{1,0:T(1,128)}', space=vmem, size = 0x12000, scoped, tag = 'internal scratch']
  #allocation2 [shape = 's32[1]{0}', space=sflag, size = 0x4, scoped, tag = 'scoped memory for tpu_custom_call.1']
  #allocation3 [shape = 'u8[512]{0}', space=smem, size = 0x200, scoped, tag = 'prefetched SMEM operand 0']
  %s0 = inlined_call_operand.vmem [shape: s32[6], index: 0, kind: input, shape index: {}]
  %s1 = inlined_call_operand.vmem [shape: s32[16,6], index: 1, kind: input, shape index: {}]
  %s2 = inlined_call_operand.vmem [shape: f32[160,32], index: 2, kind: input, shape index: {}]
  %s3 = inlined_call_operand.hbm [shape: f32[16,32], index: 3, kind: output, shape index: {}]
  %s4 = sld [smem:[#allocation0]]
  $region18: #{tpu_custom_call.1} parent=0
    _
  %s6 = ssub.s32 1, %s4
  %s7 = scalar_select 0, %s6, %s4
  %s8 = sshll.u32 %s0, 4
  %s9 = int_to_ptr.vmem [resolvable:$true] %s8
  %11 = dma.vmem_to_smem %s9, 16, [#allocation3], [#allocation2]
  %12 = dma.done [#allocation2], 16
  %13 = sfence
  $region1: #{tpu_custom_call.1} parent=0
    #allocation4 [shape = 'u8[8192]{0}', space=vmem, size = 0x2000, scoped, tag = 'output window, operand 0, single buffered']
    #allocation5 [shape = 's32[1]{0}', space=sflag, size = 0x4, scoped, tag = 'scoped memory for tpu_custom_call.1']
    %14 = vsyncpa [#allocation5], 0
    // Predicated region
    $region2: #{tpu_custom_call.1} parent=1 // pred_check
      _
    $region3: #{tpu_custom_call.1} parent=1 // pred_check_branch
      %16 = sbr.rel (0) target = $region5
    $region4: #{tpu_custom_call.1} parent=1 // pred_region
      _
    $region5: #{tpu_custom_call.1} parent=1 // pred_fallthru
      _
    // Predicated region
    $region6: #{tpu_custom_call.1} parent=1 // pred_check
      _
    $region7: #{tpu_custom_call.1} parent=1 // pred_check_branch
      %18 = sbr.rel (0) target = $region9
    $region8: #{tpu_custom_call.1} parent=1 // pred_region
      _
    $region9: #{tpu_custom_call.1} parent=1 // pred_fallthru
      _
    %v19 = vld [vmem:[%s1] sm:$0xff]
    %v20 = vld [vmem:[%s1 + $0x8] sm:$0xff]
    %v21 = vld [vmem:[%s2] sm:$0xff]
    %v22 = vld [vmem:[%s2 + $0x8] sm:$0xff]
    %v23 = vld [vmem:[%s2 + $0x10] sm:$0xff]
    %v24 = vld [vmem:[%s2 + $0x18] sm:$0xff]
    %v25 = vld [vmem:[%s2 + $0x20] sm:$0xff]
    %v26 = vld [vmem:[%s2 + $0x28] sm:$0xff]
    %v27 = vld [vmem:[%s2 + $0x30] sm:$0xff]
    %v28 = vld [vmem:[%s2 + $0x38] sm:$0xff]
    %v29 = vld [vmem:[%s2 + $0x40] sm:$0xff]
    %v30 = vld [vmem:[%s2 + $0x48] sm:$0xff]
    %v31 = vld [vmem:[%s2 + $0x50] sm:$0xff]
    %v32 = vld [vmem:[%s2 + $0x58] sm:$0xff]
    %v33 = vld [vmem:[%s2 + $0x60] sm:$0xff]
    %v34 = vld [vmem:[%s2 + $0x68] sm:$0xff]
    %v35 = vld [vmem:[%s2 + $0x70] sm:$0xff]
    %v36 = vld [vmem:[%s2 + $0x78] sm:$0xff]
    %v37 = vld [vmem:[%s2 + $0x80] sm:$0xff]
    %v38 = vld [vmem:[%s2 + $0x88] sm:$0xff]
    %v39 = vld [vmem:[%s2 + $0x90] sm:$0xff]
    %v40 = vld [vmem:[%s2 + $0x98] sm:$0xff]
    %v41 = vlaneseq
    %v42 = vand.u32 %v41, 127
    %v43 = vadd.s32 %v42, 128
    %s44 = sld [smem:[#allocation3]]
    %v45 = vstv %s44
    %v46 = vadd.s32 %v19, %v45
    %v47 = vadd.s32 %v20, %v45
    %48 = vset.pattern.permute.xlu0 0
    %49 = vperm.xlu0 %48, %v46
    %v50 = vpop.permute.xlu0 %49
    %51 = vset.pattern.permute.xlu0 0
    %52 = vperm.xlu0 %51, %v47
    %v53 = vpop.permute.xlu0 %52
    %vm54 = vcmp.eq.s32.totalorder %v50, %v42
    %vm55 = vcmp.eq.s32.totalorder %v50, %v43
    %vm56 = vcmp.eq.s32.totalorder %v53, %v42
    %vm57 = vcmp.eq.s32.totalorder %v53, %v43
    %s58 = sld [smem:[#allocation3 + $0x1]]
    %v59 = vstv %s58
    %v60 = vadd.s32 %v19, %v59
    %v61 = vadd.s32 %v20, %v59
    %62 = vset.pattern.permute.xlu0 1
    %63 = vperm.xlu0 %62, %v60
    %v64 = vpop.permute.xlu0 %63
    %65 = vset.pattern.permute.xlu0 1
    %66 = vperm.xlu0 %65, %v61
    %v67 = vpop.permute.xlu0 %66
    %vm68 = vcmp.eq.s32.totalorder %v64, %v42
    %vm69 = vcmp.eq.s32.totalorder %v64, %v43
    %vm70 = vcmp.eq.s32.totalorder %v67, %v42
    %vm71 = vcmp.eq.s32.totalorder %v67, %v43
    %vm72 = vmor %vm54, %vm68
    %vm73 = vmor %vm55, %vm69
    %vm74 = vmor %vm56, %vm70
    %vm75 = vmor %vm57, %vm71
    %s76 = sld [smem:[#allocation3 + $0x2]]
    %v77 = vstv %s76
    %v78 = vadd.s32 %v19, %v77
    %v79 = vadd.s32 %v20, %v77
    %80 = vset.pattern.permute.xlu0 2
    %81 = vperm.xlu0 %80, %v78
    %v82 = vpop.permute.xlu0 %81
    %83 = vset.pattern.permute.xlu0 2
    %84 = vperm.xlu0 %83, %v79
    %v85 = vpop.permute.xlu0 %84
    %vm86 = vcmp.eq.s32.totalorder %v82, %v42
    %vm87 = vcmp.eq.s32.totalorder %v82, %v43
    %vm88 = vcmp.eq.s32.totalorder %v85, %v42
    %vm89 = vcmp.eq.s32.totalorder %v85, %v43
    %vm90 = vmor %vm72, %vm86
    %vm91 = vmor %vm73, %vm87
    %vm92 = vmor %vm74, %vm88
    %vm93 = vmor %vm75, %vm89
    %s94 = sld [smem:[#allocation3 + $0x3]]
    %v95 = vstv %s94
    %v96 = vadd.s32 %v19, %v95
    %v97 = vadd.s32 %v20, %v95
    %98 = vset.pattern.permute.xlu0 3
    %99 = vperm.xlu0 %98, %v96
    %v100 = vpop.permute.xlu0 %99
    %101 = vset.pattern.permute.xlu0 3
    %102 = vperm.xlu0 %101, %v97
    %v103 = vpop.permute.xlu0 %102
    %vm104 = vcmp.eq.s32.totalorder %v100, %v42
    %vm105 = vcmp.eq.s32.totalorder %v100, %v43
    %vm106 = vcmp.eq.s32.totalorder %v103, %v42
    %vm107 = vcmp.eq.s32.totalorder %v103, %v43
    %vm108 = vmor %vm90, %vm104
    %vm109 = vmor %vm91, %vm105
    %vm110 = vmor %vm92, %vm106
    %vm111 = vmor %vm93, %vm107
    %s112 = sld [smem:[#allocation3 + $0x4]]
    %v113 = vstv %s112
    %v114 = vadd.s32 %v19, %v113
    %v115 = vadd.s32 %v20, %v113
    %116 = vset.pattern.permute.xlu0 4
    %117 = vperm.xlu0 %116, %v114
    %v118 = vpop.permute.xlu0 %117
    %119 = vset.pattern.permute.xlu0 4
    %120 = vperm.xlu0 %119, %v115
    %v121 = vpop.permute.xlu0 %120
    %vm122 = vcmp.eq.s32.totalorder %v118, %v42
    %vm123 = vcmp.eq.s32.totalorder %v118, %v43
    %vm124 = vcmp.eq.s32.totalorder %v121, %v42
    %vm125 = vcmp.eq.s32.totalorder %v121, %v43
    %vm126 = vmor %vm108, %vm122
    %vm127 = vmor %vm109, %vm123
    %vm128 = vmor %vm110, %vm124
    %vm129 = vmor %vm111, %vm125
    %s130 = sld [smem:[#allocation3 + $0x5]]
    %v131 = vstv %s130
    %v132 = vadd.s32 %v19, %v131
    %v133 = vadd.s32 %v20, %v131
    %134 = vset.pattern.permute.xlu0 5
    %135 = vperm.xlu0 %134, %v132
    %v136 = vpop.permute.xlu0 %135
    %137 = vset.pattern.permute.xlu0 5
    %138 = vperm.xlu0 %137, %v133
    %v139 = vpop.permute.xlu0 %138
    %vm140 = vcmp.eq.s32.totalorder %v136, %v42
    %vm141 = vcmp.eq.s32.totalorder %v136, %v43
    %vm142 = vcmp.eq.s32.totalorder %v139, %v42
    %vm143 = vcmp.eq.s32.totalorder %v139, %v43
    %vm144 = vmor %vm126, %vm140
    %vm145 = vmor %vm127, %vm141
    %vm146 = vmor %vm128, %vm142
    %vm147 = vmor %vm129, %vm143
    %v148 = vsel %vm144, 1, 0
    %v149 = vsel %vm145, 1, 0
    %v150 = vsel %vm146, 1, 0
    %v151 = vsel %vm147, 1, 0
    %v152 = vcvt.s32.f32 %v148
    %v153 = vcvt.s32.f32 %v149
    %v154 = vcvt.s32.f32 %v150
    %v155 = vcvt.s32.f32 %v151
    %vm156 = vcmask 261120
    %v158 = vsel %vm156, %v153, 0
    %v161 = vsel %vm156, %v155, 0
    %163 = vmatprep.subr.mxu0 0.0
    %164 = vmatpush1.msra.mxu0 %v36
    %165 = vmatprep.subr.mxu0 0.0
    %166 = vmatpush1.msra.mxu0 %v35
    %167 = vmatprep.subr.mxu0 0.0
    %168 = vmatpush1.msra.mxu0 %v34
    %169 = vmatprep.subr.mxu0 0.0
    %170 = vmatpush1.msra.mxu0 %v33
    %171 = vmatprep.subr.mxu0 0.0
    %172 = vmatpush1.msra.mxu0 %v32
    %173 = vmatprep.subr.mxu0 0.0
    %174 = vmatpush1.msra.mxu0 %v31
    %175 = vmatprep.subr.mxu0 0.0
    %176 = vmatpush1.msra.mxu0 %v30
    %177 = vmatprep.subr.mxu0 0.0
    %178 = vmatpush1.msra.mxu0 %v29
    %179 = vmatprep.subr.mxu0 0.0
    %180 = vmatpush1.msra.mxu0 %v28
    %181 = vmatprep.subr.mxu0 0.0
    %182 = vmatpush1.msra.mxu0 %v27
    %183 = vmatprep.subr.mxu0 0.0
    %184 = vmatpush1.msra.mxu0 %v26
    %185 = vmatprep.subr.mxu0 0.0
    %186 = vmatpush1.msra.mxu0 %v25
    %187 = vmatprep.subr.mxu0 0.0
    %188 = vmatpush1.msra.mxu0 %v24
    %189 = vmatprep.subr.mxu0 0.0
    %190 = vmatpush1.msra.mxu0 %v23
    %191 = vmatprep.subr.mxu0 0.0
    %192 = vmatpush1.msra.mxu0 %v22
    %193 = vmatprep.subr.mxu0 0.0
    %194 = vmatpush1.msra.mxu0 %v21
    %195 = vmatprep.subr.mxu0 0.0
    %196 = vmatpush2.msra.mxu0 0.0
    %197 = vmatprep.subr.mxu0 0.0
    %198 = vmatpush2.msra.mxu0 0.0
    %199 = vmatprep.subr.mxu0 0.0
    %200 = vmatpush2.msra.mxu0 0.0
    %201 = vmatprep.subr.mxu0 0.0
    %202 = vmatpush2.msra.mxu0 0.0
    %203 = vmatprep.subr.mxu0 0.0
    %204 = vmatpush2.msra.mxu0 0.0
    %205 = vmatprep.subr.mxu0 0.0
    %206 = vmatpush2.msra.mxu0 0.0
    %207 = vmatprep.subr.mxu0 0.0
    %208 = vmatpush2.msra.mxu0 0.0
    %209 = vmatprep.subr.mxu0 0.0
    %210 = vmatpush2.msra.mxu0 0.0
    %211 = vmatprep.subr.mxu0 0.0
    %212 = vmatpush2.msra.mxu0 0.0
    %213 = vmatprep.subr.mxu0 0.0
    %214 = vmatpush2.msra.mxu0 0.0
    %215 = vmatprep.subr.mxu0 0.0
    %216 = vmatpush2.msra.mxu0 0.0
    %217 = vmatprep.subr.mxu0 0.0
    %218 = vmatpush2.msra.mxu0 0.0
    %219 = vmatprep.subr.mxu0 0.0
    %220 = vmatpush2.msra.mxu0 %v40
    %221 = vmatprep.subr.mxu0 0.0
    %222 = vmatpush2.msra.mxu0 %v39
    %223 = vmatprep.subr.mxu0 0.0
    %224 = vmatpush2.msra.mxu0 %v38
    %225 = vmatprep.subr.mxu0 0.0
    %226 = vmatpush2.msra.mxu0 %v37
    %227 = vmatprep.mubr.f32.mxu0 %v158
    %228 = vmatmul.mubr.f32.gmra.mxu0 %v152
    %v229 = vpop.f32.mrf.mxu0
    %v230 = vadd.f32 0.0, %v229
    %v231 = vpop.f32.mrf.mxu0
    %232 = vmatprep.mubr.f32.mxu0 %v161
    %233 = vmatmul.mubr.f32.gmra.mxu0 %v154
    %v234 = vpop.f32.mrf.mxu0
    %v235 = vadd.f32 0.0, %v234
    %v236 = vpop.f32.mrf.mxu0
    %237 = vdwg.mxu0
    %238 = vst.msk [vmem:[#allocation4] sm:$0xff] %vm156, %v230
    %239 = vst.msk [vmem:[#allocation4 + $0x8] sm:$0xff] %vm156, %v235
    // Predicated region
    $region10: #{tpu_custom_call.1} parent=1 // pred_check
      _
    $region11: #{tpu_custom_call.1} parent=1 // pred_check_branch
      %241 = sbr.rel (0) target = $region13
    $region12: #{tpu_custom_call.1} parent=1 // pred_region
      %s243 = ssub.s32 256, 256
      %244 = vsyncadd [#allocation5], %s243
      %s245 = sshll.u32 [#allocation4], 4
      %s246 = int_to_ptr.vmem [resolvable:$true] %s245
      %251 = dma.vmem_to_hbm [thread:$0]  %s246, 256, %s3, [#allocation5], 128, 128, 8
    $region13: #{tpu_custom_call.1} parent=1 // pred_fallthru
      _
    // Predicated region
    $region14: #{tpu_custom_call.1} parent=1 // pred_check
      _
    $region15: #{tpu_custom_call.1} parent=1 // pred_check_branch
      %253 = sbr.rel (0) target = $region17
    $region16: #{tpu_custom_call.1} parent=1 // pred_region
      %254 = dma.done [#allocation5], 256
    $region17: #{tpu_custom_call.1} parent=1 // pred_fallthru
      _
    %255 = vsyncpa [#allocation5], 1

</llo_original>
